<compile_context>
chip_gen: v7x
topology: tpu7x:2x2x1
jax: 0.10.0
libtpu: 0.0.40
codegen_flags: <defaults>
</compile_context>

<pallas_src>
import jax
import jax.numpy as jnp
from jax.experimental import pallas as pl
from jax.experimental.pallas import tpu as pltpu


def seperate_output_kernel(x_ref, w1_ref, b1_ref, wc_ref, bc_ref, ww_ref,
                           bw_ref, cls_ref, word_ref, h_ref):
    j = pl.program_id(1)  # vocab-tile index (inner, sequential per row tile)

    @pl.when(j == 0)
    def _():
        # MLP: bf16 MXU operands, f32 accumulation; bias-add + ReLU in f32.
        h = jnp.dot(x_ref[...].astype(jnp.bfloat16), w1_ref[...],
                    preferred_element_type=jnp.float32)
        h = jnp.maximum(h + b1_ref[...], 0.0)
        h_ref[...] = h.astype(jnp.bfloat16)          # cached across vocab tiles
        # cls head over all rows of this tile (lane-padded to 128 -> unmasked
        # vst); the last-token row selection is a tiny slice in the wrapper.
        cls_ref[...] = (jnp.dot(h_ref[...], wc_ref[...],
                                preferred_element_type=jnp.float32)
                        + bc_ref[...])

    # Word head for this (row tile, vocab tile): lane-dense store.
    word_ref[...] = (jnp.dot(h_ref[...], ww_ref[...],
                             preferred_element_type=jnp.float32)
                     + bw_ref[...])


def seperate_output(x, w1, b1, wc, bc, ww, bw, *, tm=None, tv=None):
    B, S, D = x.shape
    num_cls = wc.shape[1]
    V = ww.shape[1]
    BS = B * S

    # cls head lane-padded to a multiple of 128 so its store is unmasked.
    # (D x 128 f32 = 64 KiB at D=128 — negligible per call.)
    cls_pad = ((max(num_cls, 1) + 127) // 128) * 128
    wc_p = jnp.zeros((D, cls_pad), wc.dtype).at[:, :num_cls].set(wc)
    bc_p = jnp.zeros((1, cls_pad), bc.dtype).at[:, :num_cls].set(bc)

    # bf16 MXU operands (f32 accumulation in the kernel). Padded cls columns
    # stay exactly zero after the cast, so the [:num_cls] slice is unaffected.
    # TODO(synk): hoist these weight casts/pads to parameter init so they are
    # not re-emitted per forward when weights are traced under jit.
    w1_b = w1.astype(jnp.bfloat16)
    wc_b = wc_p.astype(jnp.bfloat16)
    ww_b = ww.astype(jnp.bfloat16)

    x_flat = x.reshape(BS, D)

    # Row tiles: full BS at toy sizes, 256 rows otherwise.
    if tm is None:
        tm = BS if BS <= 256 else 256
    # Vocab lane tiles: 2048 lanes keeps double-buffered f32 output tiles well
    # inside v7x's 64 MiB VMEM while staying lane-dense.
    if tv is None:
        tv = V if V <= 2048 else 2048

    grid = (pl.cdiv(BS, tm), pl.cdiv(V, tv))

    cls_all, word_all = pl.pallas_call(
        seperate_output_kernel,
        grid=grid,
        in_specs=[
            pl.BlockSpec((tm, D), lambda i, j: (i, 0)),        # x
            pl.BlockSpec((D, D), lambda i, j: (0, 0)),         # w1  (bf16)
            pl.BlockSpec((1, D), lambda i, j: (0, 0)),         # b1  (f32)
            pl.BlockSpec((D, cls_pad), lambda i, j: (0, 0)),   # wc padded (bf16)
            pl.BlockSpec((1, cls_pad), lambda i, j: (0, 0)),   # bc padded (f32)
            pl.BlockSpec((D, tv), lambda i, j: (0, j)),        # ww  (bf16)
            pl.BlockSpec((1, tv), lambda i, j: (0, j)),        # bw  (f32)
        ],
        out_specs=[
            pl.BlockSpec((tm, cls_pad), lambda i, j: (i, 0)),  # cls slab
            pl.BlockSpec((tm, tv), lambda i, j: (i, j)),       # word slab
        ],
        out_shape=[
            jax.ShapeDtypeStruct((BS, cls_pad), jnp.float32),
            jax.ShapeDtypeStruct((BS, V), jnp.float32),
        ],
        scratch_shapes=[pltpu.VMEM((tm, D), jnp.bfloat16)],    # cached MLP h
        compiler_params=pltpu.CompilerParams(
            # Row axis can split across v7x's two TensorCores; the vocab axis
            # must stay sequential per row tile because of the h cache.
            dimension_semantics=("parallel", "arbitrary"),
            vmem_limit_bytes=32 * 1024 * 1024,
        ),
    )(x_flat, w1_b, b1, wc_b, bc_p, ww_b, bw)

    # Only cheap row slices remain (no lane slice over the full word logits).
    cls = cls_all.reshape(B, S, cls_pad)[:, -1, :num_cls]
    word = word_all.reshape(B, S, V)[:, :-1, :]
    return cls, word


def reference_f32(x, w1, b1, wc, bc, ww, bw):
    h = jnp.maximum(jnp.einsum('bsd,de->bse', x, w1) + b1[None], 0.0)
    cls = h[:, -1, :] @ wc + bc[0]
    word = jnp.einsum('bsd,dv->bsv', h[:, :-1, :], ww) + bw[None]
    return cls, word


def reference_bf16(x, w1, b1, wc, bc, ww, bw):
    # Mirrors the kernel's bf16-operand / f32-accumulate numerics.
    bf = jnp.bfloat16
    B, S, D = x.shape
    h = jnp.dot(x.reshape(B * S, D).astype(bf), w1.astype(bf),
                preferred_element_type=jnp.float32)
    h = jnp.maximum(h + b1, 0.0).astype(bf)
    cls = jnp.dot(h, wc.astype(bf), preferred_element_type=jnp.float32) + bc
    word = jnp.dot(h, ww.astype(bf), preferred_element_type=jnp.float32) + bw
    cls = cls.reshape(B, S, -1)[:, -1, :]
    word = word.reshape(B, S, -1)[:, :-1, :]
    return cls, word


if __name__ == "__main__":
    B, S, D = 2, 8, 128
    num_cls, num_vocab = 8, 256

    key = jax.random.PRNGKey(0)
    kx, k1, k2, k3, k4, k5, k6 = jax.random.split(key, 7)

    x = jax.random.normal(kx, (B, S, D), dtype=jnp.float32)

    # PyTorch layout is (out, in); we store the transpose (in, out).
    w1 = jax.random.normal(k1, (D, D), dtype=jnp.float32) * 0.02
    b1 = jax.random.normal(k2, (1, D), dtype=jnp.float32) * 0.02
    wc = jax.random.normal(k3, (D, num_cls), dtype=jnp.float32) * 0.02
    bc = jax.random.normal(k4, (1, num_cls), dtype=jnp.float32) * 0.02
    ww = jax.random.normal(k5, (D, num_vocab), dtype=jnp.float32) * 0.02
    bw = jax.random.normal(k6, (1, num_vocab), dtype=jnp.float32) * 0.02

    cls_out, word_out = seperate_output(x, w1, b1, wc, bc, ww, bw)
    jax.block_until_ready((cls_out, word_out))

    assert cls_out.shape == (B, num_cls)
    assert word_out.shape == (B, S - 1, num_vocab)

    # Tight check against a reference with matching bf16-operand numerics.
    cls_m, word_m = reference_bf16(x, w1, b1, wc, bc, ww, bw)
    assert jnp.allclose(cls_out, cls_m, atol=5e-4, rtol=5e-4)
    assert jnp.allclose(word_out, word_m, atol=5e-4, rtol=5e-4)

    # Looser check against the pure-f32 reference (bf16 MXU operand rounding).
    cls_ref, word_ref = reference_f32(x, w1, b1, wc, bc, ww, bw)
    assert jnp.allclose(cls_out, cls_ref, atol=1e-2, rtol=1e-2)
    assert jnp.allclose(word_out, word_ref, atol=1e-2, rtol=1e-2)

    print("KERNEL_OK")
</pallas_src>

<mosaic_0001>
module attributes {stable_mosaic.version = 11 : i64} {
  func.func @seperate_output_kernel(%arg0: i32, %arg1: i32, %arg2: memref<16x128xf32, #tpu.memory_space<vmem>>, %arg3: memref<128x128xbf16, #tpu.memory_space<vmem>>, %arg4: memref<1x128xf32, #tpu.memory_space<vmem>>, %arg5: memref<128x128xbf16, #tpu.memory_space<vmem>>, %arg6: memref<1x128xf32, #tpu.memory_space<vmem>>, %arg7: memref<128x256xbf16, #tpu.memory_space<vmem>>, %arg8: memref<1x256xf32, #tpu.memory_space<vmem>>, %arg9: memref<16x128xf32, #tpu.memory_space<vmem>>, %arg10: memref<16x256xf32, #tpu.memory_space<vmem>>, %arg11: memref<16x128xbf16, #tpu.memory_space<vmem>>) attributes {dimension_semantics = [#tpu.dimension_semantics<parallel>, #tpu.dimension_semantics<arbitrary>], iteration_bounds = array<i64: 1, 1>, scalar_prefetch = 0 : i64, scratch_operands = 1 : i64, tpu.core_type = #tpu.core_type<tc>, window_params = [{transform_indices = @transform_0, window_bounds = array<i64: 16, 128>}, {pipeline_mode = #tpu.pipeline_mode<synchronous>, transform_indices = @transform_1, window_bounds = array<i64: 128, 128>}, {pipeline_mode = #tpu.pipeline_mode<synchronous>, transform_indices = @transform_2, window_bounds = array<i64: 1, 128>}, {pipeline_mode = #tpu.pipeline_mode<synchronous>, transform_indices = @transform_3, window_bounds = array<i64: 128, 128>}, {pipeline_mode = #tpu.pipeline_mode<synchronous>, transform_indices = @transform_4, window_bounds = array<i64: 1, 128>}, {transform_indices = @transform_5, window_bounds = array<i64: 128, 256>}, {transform_indices = @transform_6, window_bounds = array<i64: 1, 256>}, {transform_indices = @transform_7, window_bounds = array<i64: 16, 128>}, {transform_indices = @transform_8, window_bounds = array<i64: 16, 256>}]} {
    %c0_i32 = arith.constant 0 : i32
    %0 = arith.cmpi eq, %arg1, %c0_i32 : i32
    %1 = arith.extui %0 : i1 to i32
    %c0_i32_0 = arith.constant 0 : i32
    %2 = arith.cmpi ne, %1, %c0_i32_0 : i32
    scf.if %2 {
      %c0_8 = arith.constant 0 : index
      %c0_9 = arith.constant 0 : index
      %10 = vector.load %arg2[%c0_8, %c0_9] : memref<16x128xf32, #tpu.memory_space<vmem>>, vector<16x128xf32>
      %11 = arith.truncf %10 : vector<16x128xf32> to vector<16x128xbf16>
      %c0_10 = arith.constant 0 : index
      %c0_11 = arith.constant 0 : index
      %12 = vector.load %arg3[%c0_10, %c0_11] : memref<128x128xbf16, #tpu.memory_space<vmem>>, vector<128x128xbf16>
      %cst_12 = arith.constant dense<0.000000e+00> : vector<16x128xf32>
      %13 = tpu.matmul %11, %12, %cst_12 {dimension_numbers = #tpu.dot_dimension_numbers<[1], [0], [0], [1], [0, 0, 1, 1], [], []>} : vector<16x128xbf16>, vector<128x128xbf16>, vector<16x128xf32> -> vector<16x128xf32>
      %c0_13 = arith.constant 0 : index
      %c0_14 = arith.constant 0 : index
      %14 = vector.load %arg4[%c0_13, %c0_14] : memref<1x128xf32, #tpu.memory_space<vmem>>, vector<1x128xf32>
      %15 = vector.broadcast %14 : vector<1x128xf32> to vector<16x128xf32>
      %16 = arith.addf %13, %15 : vector<16x128xf32>
      %cst_15 = arith.constant 0.000000e+00 : f32
      %17 = vector.broadcast %cst_15 : f32 to vector<16x128xf32>
      %18 = arith.maximumf %16, %17 : vector<16x128xf32>
      %19 = arith.truncf %18 : vector<16x128xf32> to vector<16x128xbf16>
      %c0_16 = arith.constant 0 : index
      %c0_17 = arith.constant 0 : index
      %20 = vector.load %arg11[%c0_16, %c0_17] : memref<16x128xbf16, #tpu.memory_space<vmem>>, vector<16x128xbf16>
      tpu.vector_store %arg11[%c0_16, %c0_17], %19 {strides = array<i32>} : memref<16x128xbf16, #tpu.memory_space<vmem>>, vector<16x128xbf16>,
      %c0_18 = arith.constant 0 : index
      %c0_19 = arith.constant 0 : index
      %21 = vector.load %arg11[%c0_18, %c0_19] : memref<16x128xbf16, #tpu.memory_space<vmem>>, vector<16x128xbf16>
      %c0_20 = arith.constant 0 : index
      %c0_21 = arith.constant 0 : index
      %22 = vector.load %arg5[%c0_20, %c0_21] : memref<128x128xbf16, #tpu.memory_space<vmem>>, vector<128x128xbf16>
      %cst_22 = arith.constant dense<0.000000e+00> : vector<16x128xf32>
      %23 = tpu.matmul %21, %22, %cst_22 {dimension_numbers = #tpu.dot_dimension_numbers<[1], [0], [0], [1], [0, 0, 1, 1], [], []>} : vector<16x128xbf16>, vector<128x128xbf16>, vector<16x128xf32> -> vector<16x128xf32>
      %c0_23 = arith.constant 0 : index
      %c0_24 = arith.constant 0 : index
      %24 = vector.load %arg6[%c0_23, %c0_24] : memref<1x128xf32, #tpu.memory_space<vmem>>, vector<1x128xf32>
      %25 = vector.broadcast %24 : vector<1x128xf32> to vector<16x128xf32>
      %26 = arith.addf %23, %25 : vector<16x128xf32>
      %c0_25 = arith.constant 0 : index
      %c0_26 = arith.constant 0 : index
      %27 = vector.load %arg9[%c0_25, %c0_26] : memref<16x128xf32, #tpu.memory_space<vmem>>, vector<16x128xf32>
      tpu.vector_store %arg9[%c0_25, %c0_26], %26 {strides = array<i32>} : memref<16x128xf32, #tpu.memory_space<vmem>>, vector<16x128xf32>,
    } else {
    }
    %c0 = arith.constant 0 : index
    %c0_1 = arith.constant 0 : index
    %3 = vector.load %arg11[%c0, %c0_1] : memref<16x128xbf16, #tpu.memory_space<vmem>>, vector<16x128xbf16>
    %c0_2 = arith.constant 0 : index
    %c0_3 = arith.constant 0 : index
    %4 = vector.load %arg7[%c0_2, %c0_3] : memref<128x256xbf16, #tpu.memory_space<vmem>>, vector<128x256xbf16>
    %cst = arith.constant dense<0.000000e+00> : vector<16x256xf32>
    %5 = tpu.matmul %3, %4, %cst {dimension_numbers = #tpu.dot_dimension_numbers<[1], [0], [0], [1], [0, 0, 1, 1], [], []>} : vector<16x128xbf16>, vector<128x256xbf16>, vector<16x256xf32> -> vector<16x256xf32>
    %c0_4 = arith.constant 0 : index
    %c0_5 = arith.constant 0 : index
    %6 = vector.load %arg8[%c0_4, %c0_5] : memref<1x256xf32, #tpu.memory_space<vmem>>, vector<1x256xf32>
    %7 = vector.broadcast %6 : vector<1x256xf32> to vector<16x256xf32>
    %8 = arith.addf %5, %7 : vector<16x256xf32>
    %c0_6 = arith.constant 0 : index
    %c0_7 = arith.constant 0 : index
    %9 = vector.load %arg10[%c0_6, %c0_7] : memref<16x256xf32, #tpu.memory_space<vmem>>, vector<16x256xf32>
    tpu.vector_store %arg10[%c0_6, %c0_7], %8 {strides = array<i32>} : memref<16x256xf32, #tpu.memory_space<vmem>>, vector<16x256xf32>,
    return
  }
  func.func @transform_0(%arg0: i32, %arg1: i32) -> (i32, i32) {
    %c0_i32 = arith.constant 0 : i32
    %c0_i32_0 = arith.constant 0 : i32
    return %arg0, %c0_i32 : i32, i32
  }
  func.func @transform_1(%arg0: i32, %arg1: i32) -> (i32, i32) {
    %c0_i32 = arith.constant 0 : i32
    %c0_i32_0 = arith.constant 0 : i32
    %c0_i32_1 = arith.constant 0 : i32
    return %c0_i32, %c0_i32_0 : i32, i32
  }
  func.func @transform_2(%arg0: i32, %arg1: i32) -> (i32, i32) {
    %c0_i32 = arith.constant 0 : i32
    %c0_i32_0 = arith.constant 0 : i32
    %c0_i32_1 = arith.constant 0 : i32
    return %c0_i32, %c0_i32_0 : i32, i32
  }
  func.func @transform_3(%arg0: i32, %arg1: i32) -> (i32, i32) {
    %c0_i32 = arith.constant 0 : i32
    %c0_i32_0 = arith.constant 0 : i32
    %c0_i32_1 = arith.constant 0 : i32
    return %c0_i32, %c0_i32_0 : i32, i32
  }
  func.func @transform_4(%arg0: i32, %arg1: i32) -> (i32, i32) {
    %c0_i32 = arith.constant 0 : i32
    %c0_i32_0 = arith.constant 0 : i32
    %c0_i32_1 = arith.constant 0 : i32
    return %c0_i32, %c0_i32_0 : i32, i32
  }
  func.func @transform_5(%arg0: i32, %arg1: i32) -> (i32, i32) {
    %c0_i32 = arith.constant 0 : i32
    %c0_i32_0 = arith.constant 0 : i32
    return %c0_i32, %arg1 : i32, i32
  }
  func.func @transform_6(%arg0: i32, %arg1: i32) -> (i32, i32) {
    %c0_i32 = arith.constant 0 : i32
    %c0_i32_0 = arith.constant 0 : i32
    return %c0_i32, %arg1 : i32, i32
  }
  func.func @transform_7(%arg0: i32, %arg1: i32) -> (i32, i32) {
    %c0_i32 = arith.constant 0 : i32
    %c0_i32_0 = arith.constant 0 : i32
    return %arg0, %c0_i32 : i32, i32
  }
  func.func @transform_8(%arg0: i32, %arg1: i32) -> (i32, i32) {
    %c0_i32 = arith.constant 0 : i32
    return %arg0, %arg1 : i32, i32
  }
}

</mosaic_0001>

<llo_original>
// kernel: tpu_custom_call.1
$region0: #{tpu_custom_call.1}
  #allocation0 [shape = 'u32[]', space=smem, size = 0x4, offset = 0x4, fixed_abs, tag = 'smem constant byte address 0x4 - core index']
  #allocation1 [shape = 'u32[144,128]{1,0:T(1,128)}', space=vmem, size = 0x12000, scoped, tag = 'internal scratch']
  #allocation2 [shape = 'bf16[16,128]{1,0:T(16,128)(2,1)}', space=vmem, size = 0x1000, scoped, tag = 'scratch operand']
  %s0 = inlined_call_operand.hbm [shape: f32[16,128], index: 0, kind: input, shape index: {}]
  %s1 = inlined_call_operand.hbm [shape: bf16[128,128], index: 1, kind: input, shape index: {}]
  %s2 = inlined_call_operand.vmem [shape: f32[1,128], index: 2, kind: input, shape index: {}]
  %s3 = inlined_call_operand.hbm [shape: bf16[128,128], index: 3, kind: input, shape index: {}]
  %s4 = inlined_call_operand.vmem [shape: f32[1,128], index: 4, kind: input, shape index: {}]
  %s5 = inlined_call_operand.hbm [shape: bf16[128,256], index: 5, kind: input, shape index: {}]
  %s6 = inlined_call_operand.vmem [shape: f32[1,256], index: 6, kind: input, shape index: {}]
  %s7 = inlined_call_operand.hbm [shape: f32[16,128], index: 7, kind: output, shape index: {0}]
  %s8 = inlined_call_operand.hbm [shape: f32[16,256], index: 8, kind: output, shape index: {1}]
  %9 = xla_tuple %s7, %s8
  %s10 = sld [smem:[#allocation0]]
  $region66: #{tpu_custom_call.1} parent=0
    _
  %s12 = ssub.s32 1, %s10
  %s13 = scalar_select 0, %s12, %s10
  $region1: #{tpu_custom_call.1} parent=0
    #allocation3 [shape = 'u8[8192]{0}', space=vmem, size = 0x2000, scoped, tag = 'input window, operand 0, single buffered']
    #allocation4 [shape = 's32[1]{0}', space=sflag, size = 0x4, scoped, tag = 'scoped memory for tpu_custom_call.1']
    #allocation5 [shape = 's32[1]{0}', space=sflag, size = 0x4, scoped, tag = 'scoped memory for tpu_custom_call.1']
    #allocation6 [shape = 'u8[32768]{0}', space=vmem, size = 0x8000, scoped, tag = 'input window, operand 1, single buffered']
    #allocation7 [shape = 's32[1]{0}', space=sflag, size = 0x4, scoped, tag = 'scoped memory for tpu_custom_call.1']
    #allocation8 [shape = 'u8[32768]{0}', space=vmem, size = 0x8000, scoped, tag = 'input window, operand 3, single buffered']
    #allocation9 [shape = 'u8[65536]{0}', space=vmem, size = 0x10000, scoped, tag = 'input window, operand 5, single buffered']
    #allocation10 [shape = 's32[1]{0}', space=sflag, size = 0x4, scoped, tag = 'scoped memory for tpu_custom_call.1']
    #allocation11 [shape = 'u8[8192]{0}', space=vmem, size = 0x2000, scoped, tag = 'output window, operand 0, single buffered']
    #allocation12 [shape = 'u8[16384]{0}', space=vmem, size = 0x4000, scoped, tag = 'output window, operand 1, single buffered']
    #allocation13 [shape = 's32[1]{0}', space=sflag, size = 0x4, scoped, tag = 'scoped memory for tpu_custom_call.1']
    %14 = vsyncpa [#allocation4], 0
    %15 = vsyncpa [#allocation7], 0
    %16 = vsyncpa [#allocation10], 0
    %17 = vsyncpa [#allocation5], 0
    %18 = vsyncpa [#allocation13], 0
    // Predicated region
    $region2: #{tpu_custom_call.1} parent=1 // pred_check
      _
    $region3: #{tpu_custom_call.1} parent=1 // pred_check_branch
      %20 = sbr.rel (0) target = $region5
    $region4: #{tpu_custom_call.1} parent=1 // pred_region
      %s22 = ssub.s32 256, 256
      %23 = vsyncadd [#allocation4], %s22
      %s24 = sshll.u32 [#allocation3], 4
      %s25 = int_to_ptr.vmem [resolvable:$true] %s24
      %30 = dma.hbm_to_vmem [thread:$0]  %s0, 256, %s25, [#allocation4], 128, 128, 8
    $region5: #{tpu_custom_call.1} parent=1 // pred_fallthru
      _
    // Predicated region
    $region6: #{tpu_custom_call.1} parent=1 // pred_check
      _
    $region7: #{tpu_custom_call.1} parent=1 // pred_check_branch
      %32 = sbr.rel (0) target = $region9
    $region8: #{tpu_custom_call.1} parent=1 // pred_region
      %s34 = ssub.s32 1024, 1024
      %35 = vsyncadd [#allocation7], %s34
      %s36 = sshll.u32 [#allocation6], 4
      %s37 = int_to_ptr.vmem [resolvable:$true] %s36
      %42 = dma.hbm_to_vmem [thread:$0]  %s1, 1024, %s37, [#allocation7], 64, 64, 4
    $region9: #{tpu_custom_call.1} parent=1 // pred_fallthru
      _
    // Predicated region
    $region10: #{tpu_custom_call.1} parent=1 // pred_check
      _
    $region11: #{tpu_custom_call.1} parent=1 // pred_check_branch
      %44 = sbr.rel (0) target = $region13
    $region12: #{tpu_custom_call.1} parent=1 // pred_region
      _
    $region13: #{tpu_custom_call.1} parent=1 // pred_fallthru
      _
    // Predicated region
    $region14: #{tpu_custom_call.1} parent=1 // pred_check
      _
    $region15: #{tpu_custom_call.1} parent=1 // pred_check_branch
      %46 = sbr.rel (0) target = $region17
    $region16: #{tpu_custom_call.1} parent=1 // pred_region
      %s48 = ssub.s32 1024, 1024
      %49 = vsyncadd [#allocation7], %s48
      %s50 = sshll.u32 [#allocation8], 4
      %s51 = int_to_ptr.vmem [resolvable:$true] %s50
      %56 = dma.hbm_to_vmem [thread:$0]  %s3, 1024, %s51, [#allocation7], 64, 64, 4
    $region17: #{tpu_custom_call.1} parent=1 // pred_fallthru
      _
    // Predicated region
    $region18: #{tpu_custom_call.1} parent=1 // pred_check
      _
    $region19: #{tpu_custom_call.1} parent=1 // pred_check_branch
      %58 = sbr.rel (0) target = $region21
    $region20: #{tpu_custom_call.1} parent=1 // pred_region
      _
    $region21: #{tpu_custom_call.1} parent=1 // pred_fallthru
      _
    // Predicated region
    $region22: #{tpu_custom_call.1} parent=1 // pred_check
      _
    $region23: #{tpu_custom_call.1} parent=1 // pred_check_branch
      %60 = sbr.rel (0) target = $region25
    $region24: #{tpu_custom_call.1} parent=1 // pred_region
      %s62 = ssub.s32 2048, 2048
      %63 = vsyncadd [#allocation10], %s62
      %s64 = sshll.u32 [#allocation9], 4
      %s65 = int_to_ptr.vmem [resolvable:$true] %s64
      %70 = dma.hbm_to_vmem [thread:$0]  %s5, 2048, %s65, [#allocation10], 128, 128, 8
    $region25: #{tpu_custom_call.1} parent=1 // pred_fallthru
      _
    // Predicated region
    $region26: #{tpu_custom_call.1} parent=1 // pred_check
      _
    $region27: #{tpu_custom_call.1} parent=1 // pred_check_branch
      %72 = sbr.rel (0) target = $region29
    $region28: #{tpu_custom_call.1} parent=1 // pred_region
      _
    $region29: #{tpu_custom_call.1} parent=1 // pred_fallthru
      _
    // Predicated region
    $region30: #{tpu_custom_call.1} parent=1 // pred_check
      _
    $region31: #{tpu_custom_call.1} parent=1 // pred_check_branch
      %74 = sbr.rel (0) target = $region33
    $region32: #{tpu_custom_call.1} parent=1 // pred_region
      %75 = dma.done [#allocation4], 256
    $region33: #{tpu_custom_call.1} parent=1 // pred_fallthru
      _
    // Predicated region
    $region34: #{tpu_custom_call.1} parent=1 // pred_check
      _
    $region35: #{tpu_custom_call.1} parent=1 // pred_check_branch
      %77 = sbr.rel (0) target = $region37
    $region36: #{tpu_custom_call.1} parent=1 // pred_region
      %78 = dma.done [#allocation7], 1024
    $region37: #{tpu_custom_call.1} parent=1 // pred_fallthru
      _
    // Predicated region
    $region38: #{tpu_custom_call.1} parent=1 // pred_check
      _
    $region39: #{tpu_custom_call.1} parent=1 // pred_check_branch
      %80 = sbr.rel (0) target = $region41
    $region40: #{tpu_custom_call.1} parent=1 // pred_region
      %81 = dma.done [#allocation7], 1024
    $region41: #{tpu_custom_call.1} parent=1 // pred_fallthru
      _
    // Predicated region
    $region42: #{tpu_custom_call.1} parent=1 // pred_check
      _
    $region43: #{tpu_custom_call.1} parent=1 // pred_check_branch
      %83 = sbr.rel (0) target = $region45
    $region44: #{tpu_custom_call.1} parent=1 // pred_region
      %84 = dma.done [#allocation10], 2048
    $region45: #{tpu_custom_call.1} parent=1 // pred_fallthru
      _
    %p86 = scmp.eq.s32.totalorder 0, 0
    // Predicated region
    $region46: #{tpu_custom_call.1} parent=1 // pred_check
      %p87 = pneg %p86
    $region47: #{tpu_custom_call.1} parent=1 // pred_check_branch
      %89 = sbr.rel (%p87) target = $region49
    $region48: #{tpu_custom_call.1} parent=1 // pred_region
      %v90 = vld [vmem:[#allocation3] sm:$0xff]
      %v91 = vld [vmem:[#allocation3 + $0x8] sm:$0xff]
      %v92 = vpack.c.bf16 %v91, %v90
      %v93 = vld [vmem:[#allocation6] sm:$0xf]
      %v94 = vld [vmem:[#allocation6 + $0x4] sm:$0xf]
      %v95 = vld [vmem:[#allocation6 + $0x8] sm:$0xf]
      %v96 = vld [vmem:[#allocation6 + $0xc] sm:$0xf]
      %v97 = vld [vmem:[#allocation6 + $0x10] sm:$0xf]
      %v98 = vld [vmem:[#allocation6 + $0x14] sm:$0xf]
      %v99 = vld [vmem:[#allocation6 + $0x18] sm:$0xf]
      %v100 = vld [vmem:[#allocation6 + $0x1c] sm:$0xf]
      %v101 = vld [vmem:[#allocation6 + $0x20] sm:$0xf]
      %v102 = vld [vmem:[#allocation6 + $0x24] sm:$0xf]
      %v103 = vld [vmem:[#allocation6 + $0x28] sm:$0xf]
      %v104 = vld [vmem:[#allocation6 + $0x2c] sm:$0xf]
      %v105 = vld [vmem:[#allocation6 + $0x30] sm:$0xf]
      %v106 = vld [vmem:[#allocation6 + $0x34] sm:$0xf]
      %v107 = vld [vmem:[#allocation6 + $0x38] sm:$0xf]
      %v108 = vld [vmem:[#allocation6 + $0x3c] sm:$0xf]
      %v109 = vld [vmem:[%s2] sm:$0x1]
      %v111 = vlaneseq
      %v112 = vshrl.u32 %v111, 7
      %v113 = vsub.s32 0, %v112
      %v114 = vrot.slane %v109, %v113
      %v132 = vunpack.c.l.b16 %v93
      %v133 = vunpack.c.l.b16 %v94
      %v134 = vunpack.c.l.b16 %v95
      %v135 = vunpack.c.l.b16 %v96
      %v136 = vunpack.c.l.b16 %v97
      %v137 = vunpack.c.l.b16 %v98
      %v138 = vunpack.c.l.b16 %v99
      %v139 = vunpack.c.l.b16 %v100
      %v140 = vunpack.c.l.b16 %v101
      %v141 = vunpack.c.l.b16 %v102
      %v142 = vunpack.c.l.b16 %v103
      %v143 = vunpack.c.l.b16 %v104
      %v144 = vunpack.c.l.b16 %v105
      %v145 = vunpack.c.l.b16 %v106
      %v146 = vunpack.c.l.b16 %v107
      %v147 = vunpack.c.l.b16 %v108
      %v148 = vpack.c.b16 %v133, %v132
      %v149 = vpack.c.b16 %v135, %v134
      %v150 = vpack.c.b16 %v137, %v136
      %v151 = vpack.c.b16 %v139, %v138
      %v152 = vpack.c.b16 %v141, %v140
      %v153 = vpack.c.b16 %v143, %v142
      %v154 = vpack.c.b16 %v145, %v144
      %v155 = vpack.c.b16 %v147, %v146
      %164 = vmatprep.subr.bf16.mxu0 0
      %165 = vmatpush1.bf16.msra.mxu0 %v148
      %166 = vmatprep.subr.bf16.mxu0 0
      %167 = vmatpush1.bf16.msra.mxu0 %v149
      %168 = vmatprep.subr.bf16.mxu0 0
      %169 = vmatpush1.bf16.msra.mxu0 %v150
      %170 = vmatprep.subr.bf16.mxu0 0
      %171 = vmatpush1.bf16.msra.mxu0 %v151
      %172 = vmatprep.subr.bf16.mxu0 0
      %173 = vmatpush1.bf16.msra.mxu0 %v152
      %174 = vmatprep.subr.bf16.mxu0 0
      %175 = vmatpush1.bf16.msra.mxu0 %v153
      %176 = vmatprep.subr.bf16.mxu0 0
      %177 = vmatpush1.bf16.msra.mxu0 %v154
      %178 = vmatprep.subr.bf16.mxu0 0
      %179 = vmatpush1.bf16.msra.mxu0 %v155
      %180 = vmatprep.subr.bf16.mxu0 0
      %181 = vmatpush1.bf16.msra.mxu0 0
      %182 = vmatprep.subr.bf16.mxu0 0
      %183 = vmatpush1.bf16.msra.mxu0 0
      %184 = vmatprep.subr.bf16.mxu0 0
      %185 = vmatpush1.bf16.msra.mxu0 0
      %186 = vmatprep.subr.bf16.mxu0 0
      %187 = vmatpush1.bf16.msra.mxu0 0
      %188 = vmatprep.subr.bf16.mxu0 0
      %189 = vmatpush1.bf16.msra.mxu0 0
      %190 = vmatprep.subr.bf16.mxu0 0
      %191 = vmatpush1.bf16.msra.mxu0 0
      %192 = vmatprep.subr.bf16.mxu0 0
      %193 = vmatpush1.bf16.msra.mxu0 0
      %194 = vmatprep.subr.bf16.mxu0 0
      %195 = vmatpush1.bf16.msra.mxu0 0
      %196 = vmatprep.mubr.bf16.mxu0 0
      %197 = vmatmul.mubr.bf16.gmra.mrb[0].mxu0 %v92
      %v198 = vpop.f32.mrb[0].mxu0
      %v199 = vadd.f32 %v114, %v198
      %v200 = vpop.f32.mrb[0].mxu0
      %v201 = vpop.f32.mrb[0].mxu0
      %v202 = vadd.f32 %v114, %v201
      %v203 = vpop.f32.mrb[0].mxu0
      %204 = vdwg.mxu0
      %v205 = vmax.f32 %v199, 0.0
      %v206 = vmax.f32 %v202, 0.0
      %v207 = vpack.c.bf16 %v206, %v205
      %208 = vst [vmem:[#allocation2] sm:$0xff] %v207
      %v209 = vld [vmem:[#allocation2] sm:$0xff]
      %v210 = vld [vmem:[#allocation8] sm:$0xf]
      %v211 = vld [vmem:[#allocation8 + $0x4] sm:$0xf]
      %v212 = vld [vmem:[#allocation8 + $0x8] sm:$0xf]
      %v213 = vld [vmem:[#allocation8 + $0xc] sm:$0xf]
      %v214 = vld [vmem:[#allocation8 + $0x10] sm:$0xf]
      %v215 = vld [vmem:[#allocation8 + $0x14] sm:$0xf]
      %v216 = vld [vmem:[#allocation8 + $0x18] sm:$0xf]
      %v217 = vld [vmem:[#allocation8 + $0x1c] sm:$0xf]
      %v218 = vld [vmem:[#allocation8 + $0x20] sm:$0xf]
      %v219 = vld [vmem:[#allocation8 + $0x24] sm:$0xf]
      %v220 = vld [vmem:[#allocation8 + $0x28] sm:$0xf]
      %v221 = vld [vmem:[#allocation8 + $0x2c] sm:$0xf]
      %v222 = vld [vmem:[#allocation8 + $0x30] sm:$0xf]
      %v223 = vld [vmem:[#allocation8 + $0x34] sm:$0xf]
      %v224 = vld [vmem:[#allocation8 + $0x38] sm:$0xf]
      %v225 = vld [vmem:[#allocation8 + $0x3c] sm:$0xf]
      %v226 = vld [vmem:[%s4] sm:$0x1]
      %v228 = vlaneseq
      %v229 = vshrl.u32 %v228, 7
      %v230 = vsub.s32 0, %v229
      %v231 = vrot.slane %v226, %v230
      %v249 = vunpack.c.l.b16 %v210
      %v250 = vunpack.c.l.b16 %v211
      %v251 = vunpack.c.l.b16 %v212
      %v252 = vunpack.c.l.b16 %v213
      %v253 = vunpack.c.l.b16 %v214
      %v254 = vunpack.c.l.b16 %v215
      %v255 = vunpack.c.l.b16 %v216
      %v256 = vunpack.c.l.b16 %v217
      %v257 = vunpack.c.l.b16 %v218
      %v258 = vunpack.c.l.b16 %v219
      %v259 = vunpack.c.l.b16 %v220
      %v260 = vunpack.c.l.b16 %v221
      %v261 = vunpack.c.l.b16 %v222
      %v262 = vunpack.c.l.b16 %v223
      %v263 = vunpack.c.l.b16 %v224
      %v264 = vunpack.c.l.b16 %v225
      %v265 = vpack.c.b16 %v250, %v249
      %v266 = vpack.c.b16 %v252, %v251
      %v267 = vpack.c.b16 %v254, %v253
      %v268 = vpack.c.b16 %v256, %v255
      %v269 = vpack.c.b16 %v258, %v257
      %v270 = vpack.c.b16 %v260, %v259
      %v271 = vpack.c.b16 %v262, %v261
      %v272 = vpack.c.b16 %v264, %v263
      %281 = vmatprep.subr.bf16.mxu0 0
      %282 = vmatpush1.bf16.msra.mxu0 %v265
      %283 = vmatprep.subr.bf16.mxu0 0
      %284 = vmatpush1.bf16.msra.mxu0 %v266
      %285 = vmatprep.subr.bf16.mxu0 0
      %286 = vmatpush1.bf16.msra.mxu0 %v267
      %287 = vmatprep.subr.bf16.mxu0 0
      %288 = vmatpush1.bf16.msra.mxu0 %v268
      %289 = vmatprep.subr.bf16.mxu0 0
      %290 = vmatpush1.bf16.msra.mxu0 %v269
      %291 = vmatprep.subr.bf16.mxu0 0
      %292 = vmatpush1.bf16.msra.mxu0 %v270
      %293 = vmatprep.subr.bf16.mxu0 0
      %294 = vmatpush1.bf16.msra.mxu0 %v271
      %295 = vmatprep.subr.bf16.mxu0 0
      %296 = vmatpush1.bf16.msra.mxu0 %v272
      %297 = vmatprep.subr.bf16.mxu0 0
      %298 = vmatpush1.bf16.msra.mxu0 0
      %299 = vmatprep.subr.bf16.mxu0 0
      %300 = vmatpush1.bf16.msra.mxu0 0
      %301 = vmatprep.subr.bf16.mxu0 0
      %302 = vmatpush1.bf16.msra.mxu0 0
      %303 = vmatprep.subr.bf16.mxu0 0
      %304 = vmatpush1.bf16.msra.mxu0 0
      %305 = vmatprep.subr.bf16.mxu0 0
      %306 = vmatpush1.bf16.msra.mxu0 0
      %307 = vmatprep.subr.bf16.mxu0 0
      %308 = vmatpush1.bf16.msra.mxu0 0
      %309 = vmatprep.subr.bf16.mxu0 0
      %310 = vmatpush1.bf16.msra.mxu0 0
      %311 = vmatprep.subr.bf16.mxu0 0
      %312 = vmatpush1.bf16.msra.mxu0 0
      %313 = vmatprep.mubr.bf16.mxu0 0
      %314 = vmatmul.mubr.bf16.gmra.mrb[0].mxu0 %v209
      %v315 = vpop.f32.mrb[0].mxu0
      %v316 = vadd.f32 %v231, %v315
      %v317 = vpop.f32.mrb[0].mxu0
      %v318 = vpop.f32.mrb[0].mxu0
      %v319 = vadd.f32 %v231, %v318
      %v320 = vpop.f32.mrb[0].mxu0
      %321 = vdwg.mxu0
      %322 = vst [vmem:[#allocation11] sm:$0xff] %v316
      %323 = vst [vmem:[#allocation11 + $0x8] sm:$0xff] %v319
    $region49: #{tpu_custom_call.1} parent=1 // pred_fallthru
      _
    %v324 = vld [vmem:[#allocation2] sm:$0xff]
    %v325 = vld [vmem:[#allocation9] sm:$0xff]
    %v326 = vld [vmem:[#allocation9 + $0x8] sm:$0xff]
    %v327 = vld [vmem:[#allocation9 + $0x10] sm:$0xff]
    %v328 = vld [vmem:[#allocation9 + $0x18] sm:$0xff]
    %v329 = vld [vmem:[#allocation9 + $0x20] sm:$0xff]
    %v330 = vld [vmem:[#allocation9 + $0x28] sm:$0xff]
    %v331 = vld [vmem:[#allocation9 + $0x30] sm:$0xff]
    %v332 = vld [vmem:[#allocation9 + $0x38] sm:$0xff]
    %v333 = vld [vmem:[#allocation9 + $0x40] sm:$0xff]
    %v334 = vld [vmem:[#allocation9 + $0x48] sm:$0xff]
    %v335 = vld [vmem:[#allocation9 + $0x50] sm:$0xff]
    %v336 = vld [vmem:[#allocation9 + $0x58] sm:$0xff]
    %v337 = vld [vmem:[#allocation9 + $0x60] sm:$0xff]
    %v338 = vld [vmem:[#allocation9 + $0x68] sm:$0xff]
    %v339 = vld [vmem:[#allocation9 + $0x70] sm:$0xff]
    %v340 = vld [vmem:[#allocation9 + $0x78] sm:$0xff]
    %v341 = vld [vmem:[%s6] sm:$0x3]
    %v343 = vlaneseq
    %v344 = vshrl.u32 %v343, 7
    %v345 = vsub.s32 0, %v344
    %v346 = vrot.slane %v341, %v345
    %v347 = vlaneseq
    %v348 = vshrl.u32 %v347, 7
    %v349 = vsub.s32 1, %v348
    %v350 = vrot.slane %v341, %v349
    %v369 = vunpack.c.l.b16 %v325
    %v370 = vunpack.c.h.b16 %v325
    %v371 = vunpack.c.l.b16 %v326
    %v372 = vunpack.c.h.b16 %v326
    %v373 = vunpack.c.l.b16 %v327
    %v374 = vunpack.c.h.b16 %v327
    %v375 = vunpack.c.l.b16 %v328
    %v376 = vunpack.c.h.b16 %v328
    %v377 = vunpack.c.l.b16 %v329
    %v378 = vunpack.c.h.b16 %v329
    %v379 = vunpack.c.l.b16 %v330
    %v380 = vunpack.c.h.b16 %v330
    %v381 = vunpack.c.l.b16 %v331
    %v382 = vunpack.c.h.b16 %v331
    %v383 = vunpack.c.l.b16 %v332
    %v384 = vunpack.c.h.b16 %v332
    %v385 = vunpack.c.l.b16 %v333
    %v386 = vunpack.c.h.b16 %v333
    %v387 = vunpack.c.l.b16 %v334
    %v388 = vunpack.c.h.b16 %v334
    %v389 = vunpack.c.l.b16 %v335
    %v390 = vunpack.c.h.b16 %v335
    %v391 = vunpack.c.l.b16 %v336
    %v392 = vunpack.c.h.b16 %v336
    %v393 = vunpack.c.l.b16 %v337
    %v394 = vunpack.c.h.b16 %v337
    %v395 = vunpack.c.l.b16 %v338
    %v396 = vunpack.c.h.b16 %v338
    %v397 = vunpack.c.l.b16 %v339
    %v398 = vunpack.c.h.b16 %v339
    %v399 = vunpack.c.l.b16 %v340
    %v400 = vunpack.c.h.b16 %v340
    %v401 = vpack.c.b16 %v371, %v369
    %v402 = vpack.c.b16 %v372, %v370
    %v403 = vpack.c.b16 %v375, %v373
    %v404 = vpack.c.b16 %v376, %v374
    %v405 = vpack.c.b16 %v379, %v377
    %v406 = vpack.c.b16 %v380, %v378
    %v407 = vpack.c.b16 %v383, %v381
    %v408 = vpack.c.b16 %v384, %v382
    %v409 = vpack.c.b16 %v387, %v385
    %v410 = vpack.c.b16 %v388, %v386
    %v411 = vpack.c.b16 %v391, %v389
    %v412 = vpack.c.b16 %v392, %v390
    %v413 = vpack.c.b16 %v395, %v393
    %v414 = vpack.c.b16 %v396, %v394
    %v415 = vpack.c.b16 %v399, %v397
    %v416 = vpack.c.b16 %v400, %v398
    %433 = vmatprep.subr.bf16.mxu0 %v402
    %434 = vmatpush1.bf16.msra.mxu0 %v401
    %435 = vmatprep.subr.bf16.mxu0 %v404
    %436 = vmatpush1.bf16.msra.mxu0 %v403
    %437 = vmatprep.subr.bf16.mxu0 %v406
    %438 = vmatpush1.bf16.msra.mxu0 %v405
    %439 = vmatprep.subr.bf16.mxu0 %v408
    %440 = vmatpush1.bf16.msra.mxu0 %v407
    %441 = vmatprep.subr.bf16.mxu0 %v410
    %442 = vmatpush1.bf16.msra.mxu0 %v409
    %443 = vmatprep.subr.bf16.mxu0 %v412
    %444 = vmatpush1.bf16.msra.mxu0 %v411
    %445 = vmatprep.subr.bf16.mxu0 %v414
    %446 = vmatpush1.bf16.msra.mxu0 %v413
    %447 = vmatprep.subr.bf16.mxu0 %v416
    %448 = vmatpush1.bf16.msra.mxu0 %v415
    %449 = vmatprep.subr.bf16.mxu0 0
    %450 = vmatpush1.bf16.msra.mxu0 0
    %451 = vmatprep.subr.bf16.mxu0 0
    %452 = vmatpush1.bf16.msra.mxu0 0
    %453 = vmatprep.subr.bf16.mxu0 0
    %454 = vmatpush1.bf16.msra.mxu0 0
    %455 = vmatprep.subr.bf16.mxu0 0
    %456 = vmatpush1.bf16.msra.mxu0 0
    %457 = vmatprep.subr.bf16.mxu0 0
    %458 = vmatpush1.bf16.msra.mxu0 0
    %459 = vmatprep.subr.bf16.mxu0 0
    %460 = vmatpush1.bf16.msra.mxu0 0
    %461 = vmatprep.subr.bf16.mxu0 0
    %462 = vmatpush1.bf16.msra.mxu0 0
    %463 = vmatprep.subr.bf16.mxu0 0
    %464 = vmatpush1.bf16.msra.mxu0 0
    %465 = vmatprep.mubr.bf16.mxu0 0
    %466 = vmatmul.mubr.bf16.gmra.mrb[0].mxu0 %v324
    %v467 = vpop.f32.mrb[0].mxu0
    %v468 = vadd.f32 %v346, %v467
    %v469 = vpop.f32.mrb[0].mxu0
    %v470 = vadd.f32 %v350, %v469
    %v471 = vpop.f32.mrb[0].mxu0
    %v472 = vadd.f32 %v346, %v471
    %v473 = vpop.f32.mrb[0].mxu0
    %v474 = vadd.f32 %v350, %v473
    %475 = vdwg.mxu0
    %476 = vst [vmem:[#allocation12] sm:$0xff] %v468
    %477 = vst [vmem:[#allocation12 + $0x8] sm:$0xff] %v470
    %478 = vst [vmem:[#allocation12 + $0x10] sm:$0xff] %v472
    %479 = vst [vmem:[#allocation12 + $0x18] sm:$0xff] %v474
    // Predicated region
    $region50: #{tpu_custom_call.1} parent=1 // pred_check
      _
    $region51: #{tpu_custom_call.1} parent=1 // pred_check_branch
      %481 = sbr.rel (0) target = $region53
    $region52: #{tpu_custom_call.1} parent=1 // pred_region
      %s483 = ssub.s32 256, 256
      %484 = vsyncadd [#allocation5], %s483
      %s485 = sshll.u32 [#allocation11], 4
      %s486 = int_to_ptr.vmem [resolvable:$true] %s485
      %491 = dma.vmem_to_hbm [thread:$0]  %s486, 256, %s7, [#allocation5], 128, 128, 8
    $region53: #{tpu_custom_call.1} parent=1 // pred_fallthru
      _
    // Predicated region
    $region54: #{tpu_custom_call.1} parent=1 // pred_check
      _
    $region55: #{tpu_custom_call.1} parent=1 // pred_check_branch
      %493 = sbr.rel (0) target = $region57
    $region56: #{tpu_custom_call.1} parent=1 // pred_region
      %s495 = ssub.s32 512, 512
      %496 = vsyncadd [#allocation13], %s495
      %s497 = sshll.u32 [#allocation12], 4
      %s498 = int_to_ptr.vmem [resolvable:$true] %s497
      %503 = dma.vmem_to_hbm [thread:$0]  %s498, 512, %s8, [#allocation13], 256, 256, 16
    $region57: #{tpu_custom_call.1} parent=1 // pred_fallthru
      _
    // Predicated region
    $region58: #{tpu_custom_call.1} parent=1 // pred_check
      _
    $region59: #{tpu_custom_call.1} parent=1 // pred_check_branch
      %505 = sbr.rel (0) target = $region61
    $region60: #{tpu_custom_call.1} parent=1 // pred_region
      %506 = dma.done [#allocation5], 256
    $region61: #{tpu_custom_call.1} parent=1 // pred_fallthru
      _
    // Predicated region
    $region62: #{tpu_custom_call.1} parent=1 // pred_check
      _
    $region63: #{tpu_custom_call.1} parent=1 // pred_check_branch
      %508 = sbr.rel (0) target = $region65
    $region64: #{tpu_custom_call.1} parent=1 // pred_region
      %509 = dma.done [#allocation13], 512
    $region65: #{tpu_custom_call.1} parent=1 // pred_fallthru
      _
    %510 = vsyncpa [#allocation4], 1
    %511 = vsyncpa [#allocation7], 1
    %512 = vsyncpa [#allocation10], 1
    %513 = vsyncpa [#allocation5], 1
    %514 = vsyncpa [#allocation13], 1

</llo_original>
